<compile_context>
chip_gen: v7x
topology: tpu7x:2x2x1
jax: 0.10.0
libtpu: 0.0.40
codegen_flags: <defaults>
</compile_context>

<pallas_src>
import jax
import jax.numpy as jnp
from jax.experimental import pallas as pl
from jax.experimental.pallas import tpu as pltpu


def _min_pool_kernel(h_ref, m_ref, o_ref):
    # h_ref: (bB, tS, bH) hidden-state tile (kept in input dtype)
    # m_ref: (bB, tS, 1)  attention-mask tile (broadcast over lanes)
    # o_ref: (bB, bH)     resident accumulator / output tile (float32)
    s = pl.program_id(2)

    @pl.when(s == 0)
    def _():
        o_ref[...] = jnp.full_like(o_ref, jnp.inf)

    h = h_ref[...]                                   # (bB, tS, bH)
    m = m_ref[...]                                   # (bB, tS, 1)
    fill = jnp.asarray(0.0001, dtype=h.dtype)
    # PyTorch: embeddings[input_mask_expanded == 0] = 0.0001
    masked = jnp.where(m == 0, fill, h)              # lane-broadcast of mask
    # partial min over this S-tile, accumulate in fp32
    part = jnp.min(masked, axis=1).astype(o_ref.dtype)
    o_ref[...] = jnp.minimum(o_ref[...], part)


def _largest_divisor_tile(dim, target, align):
    """Largest t <= target with t % align == 0 and dim % t == 0, else dim."""
    if dim <= target:
        return dim
    t = (target // align) * align
    while t >= align:
        if dim % t == 0:
            return t
        t -= align
    return dim


def _choose_tiles(B, S, H, itemsize, tile_bytes=4 * 1024 * 1024):
    # Batch tile: 8 (sublane aligned for the (bB, bH) output block) when
    # possible, otherwise the full batch dim (full dims are always legal).
    bB = 8 if (B >= 8 and B % 8 == 0) else B
    # Hidden tile: lane-dense output (multiple of 128) up to 512 lanes.
    bH = _largest_divisor_tile(H, 512, 128)
    # Sequence tile: fill the remaining budget (~tile_bytes per hidden tile).
    max_ts = max(8, tile_bytes // max(1, bB * bH * itemsize))
    tS = _largest_divisor_tile(S, max_ts, 8)
    return bB, tS, bH


def min_pooling(last_hidden_state, attention_mask,
                block_b=None, block_s=None, block_h=None):
    """Pallas MinPooling forward.

    last_hidden_state: (B, S, H) float (fp32 or bf16)
    attention_mask:    (B, S)    int or float (0 = padding)
    returns:           (B, H)    float32
    """
    B, S, H = last_hidden_state.shape
    itemsize = jnp.dtype(last_hidden_state.dtype).itemsize
    auto_b, auto_s, auto_h = _choose_tiles(B, S, H, itemsize)
    bB = auto_b if block_b is None else block_b
    tS = auto_s if block_s is None else block_s
    bH = auto_h if block_h is None else block_h
    assert B % bB == 0 and S % tS == 0 and H % bH == 0, "tiles must divide dims"

    grid = (B // bB, H // bH, S // tS)

    # Pre-expand the mask to (B, S, 1): in-kernel broadcast becomes a cheap
    # lane-broadcast instead of an XLU relayout.
    mask3 = attention_mask.reshape(B, S, 1).astype(jnp.int32)

    return pl.pallas_call(
        _min_pool_kernel,
        out_shape=jax.ShapeDtypeStruct((B, H), jnp.float32),
        grid_spec=pltpu.PrefetchScalarGridSpec(
            num_scalar_prefetch=0,
            grid=grid,
            in_specs=[
                # hidden-state tile: (bB, tS, bH), streamed over S
                pl.BlockSpec((bB, tS, bH), lambda b, h, s: (b, s, h)),
                # mask tile: (bB, tS, 1)
                pl.BlockSpec((bB, tS, 1), lambda b, h, s: (b, s, 0)),
            ],
            # output block does NOT depend on s -> resident accumulator
            out_specs=pl.BlockSpec((bB, bH), lambda b, h, s: (b, h)),
        ),
        compiler_params=pltpu.CompilerParams(
            dimension_semantics=("parallel", "parallel", "arbitrary"),
        ),
    )(last_hidden_state, mask3)


def _reference(last_hidden_state, attention_mask):
    # Pure-JAX reference mirroring the PyTorch MinPooling code path.
    mask = attention_mask[:, :, None].astype(jnp.float32)
    emb = jnp.where(mask == 0.0, jnp.float32(0.0001),
                    last_hidden_state.astype(jnp.float32))
    return jnp.min(emb, axis=1)


if __name__ == "__main__":
    key = jax.random.PRNGKey(0)
    k1, k2, k3 = jax.random.split(key, 3)

    # --- small shape consistent with the module (single grid step) ---
    B, S, H = 2, 8, 32
    hs = jax.random.normal(k1, (B, S, H), dtype=jnp.float32)
    lengths = jnp.array([8, 5], dtype=jnp.int32)
    mask = (jnp.arange(S)[None, :] < lengths[:, None]).astype(jnp.int32)

    out = min_pooling(hs, mask)
    out = jax.block_until_ready(out)
    ref = _reference(hs, mask)
    assert out.shape == (B, H)
    assert jnp.allclose(out, ref, atol=1e-6, rtol=1e-6)

    # --- slightly larger shape that exercises the tiled grid / S-streaming ---
    B2, S2, H2 = 8, 64, 256
    hs2 = jax.random.normal(k2, (B2, S2, H2), dtype=jnp.float32)
    lengths2 = jax.random.randint(k3, (B2,), minval=1, maxval=S2 + 1)
    mask2 = (jnp.arange(S2)[None, :] < lengths2[:, None]).astype(jnp.int32)

    # explicit tiles -> grid = (1, 2, 4): multi-step min accumulation over S
    out2 = min_pooling(hs2, mask2, block_b=8, block_s=16, block_h=128)
    out2 = jax.block_until_ready(out2)
    ref2 = _reference(hs2, mask2)
    assert out2.shape == (B2, H2)
    assert jnp.allclose(out2, ref2, atol=1e-6, rtol=1e-6)

    print("KERNEL_OK")
</pallas_src>

<mosaic_0001>
module attributes {stable_mosaic.version = 11 : i64} {
  func.func @_min_pool_kernel(%arg0: i32, %arg1: i32, %arg2: i32, %arg3: memref<2x8x32xf32, #tpu.memory_space<vmem>>, %arg4: memref<2x8x1xi32, #tpu.memory_space<vmem>>, %arg5: memref<2x32xf32, #tpu.memory_space<vmem>>) attributes {dimension_semantics = [#tpu.dimension_semantics<parallel>, #tpu.dimension_semantics<parallel>, #tpu.dimension_semantics<arbitrary>], iteration_bounds = array<i64: 1, 1, 1>, scalar_prefetch = 0 : i64, scratch_operands = 0 : i64, tpu.core_type = #tpu.core_type<tc>, window_params = [{transform_indices = @transform_0, window_bounds = array<i64: 2, 8, 32>}, {transform_indices = @transform_1, window_bounds = array<i64: 2, 8, 1>}, {transform_indices = @transform_2, window_bounds = array<i64: 2, 32>}]} {
    %c0_i32 = arith.constant 0 : i32
    %0 = arith.cmpi eq, %arg2, %c0_i32 : i32
    %1 = arith.extui %0 : i1 to i32
    %c0_i32_0 = arith.constant 0 : i32
    %2 = arith.cmpi ne, %1, %c0_i32_0 : i32
    scf.if %2 {
      %cst_12 = arith.constant 0x7F800000 : f32
      %15 = vector.broadcast %cst_12 : f32 to vector<2x32xf32>
      %c0_13 = arith.constant 0 : index
      %c0_14 = arith.constant 0 : index
      %16 = vector.load %arg5[%c0_13, %c0_14] : memref<2x32xf32, #tpu.memory_space<vmem>>, vector<2x32xf32>
      tpu.vector_store %arg5[%c0_13, %c0_14], %15 {strides = array<i32>} : memref<2x32xf32, #tpu.memory_space<vmem>>, vector<2x32xf32>,
    } else {
    }
    %c0 = arith.constant 0 : index
    %c0_1 = arith.constant 0 : index
    %c0_2 = arith.constant 0 : index
    %3 = vector.load %arg3[%c0, %c0_1, %c0_2] : memref<2x8x32xf32, #tpu.memory_space<vmem>>, vector<2x8x32xf32>
    %c0_3 = arith.constant 0 : index
    %c0_4 = arith.constant 0 : index
    %c0_5 = arith.constant 0 : index
    %4 = vector.load %arg4[%c0_3, %c0_4, %c0_5] : memref<2x8x1xi32, #tpu.memory_space<vmem>>, vector<2x8x1xi32>
    %c0_i32_6 = arith.constant 0 : i32
    %5 = vector.broadcast %c0_i32_6 : i32 to vector<2x8x1xi32>
    %6 = arith.cmpi eq, %4, %5 : vector<2x8x1xi32>
    %cst = arith.constant 9.99999974E-5 : f32
    %7 = vector.shape_cast %6 : vector<2x8x1xi1> to vector<2x8x1xi1>
    %8 = vector.broadcast %7 : vector<2x8x1xi1> to vector<2x8x32xi1>
    %9 = vector.broadcast %cst : f32 to vector<2x8x32xf32>
    %10 = arith.select %8, %9, %3 : vector<2x8x32xi1>, vector<2x8x32xf32>
    %cst_7 = arith.constant dense<0x7F800000> : vector<2x32xf32>
    %11 = vector.multi_reduction <minimumf>, %10, %cst_7 [1] : vector<2x8x32xf32> to vector<2x32xf32>
    %c0_8 = arith.constant 0 : index
    %c0_9 = arith.constant 0 : index
    %12 = vector.load %arg5[%c0_8, %c0_9] : memref<2x32xf32, #tpu.memory_space<vmem>>, vector<2x32xf32>
    %13 = arith.minimumf %12, %11 : vector<2x32xf32>
    %c0_10 = arith.constant 0 : index
    %c0_11 = arith.constant 0 : index
    %14 = vector.load %arg5[%c0_10, %c0_11] : memref<2x32xf32, #tpu.memory_space<vmem>>, vector<2x32xf32>
    tpu.vector_store %arg5[%c0_10, %c0_11], %13 {strides = array<i32>} : memref<2x32xf32, #tpu.memory_space<vmem>>, vector<2x32xf32>,
    return
  }
  func.func @transform_0(%arg0: i32, %arg1: i32, %arg2: i32) -> (i32, i32, i32) {
    %c0_i32 = arith.constant 0 : i32
    return %arg0, %arg2, %arg1 : i32, i32, i32
  }
  func.func @transform_1(%arg0: i32, %arg1: i32, %arg2: i32) -> (i32, i32, i32) {
    %c0_i32 = arith.constant 0 : i32
    %c0_i32_0 = arith.constant 0 : i32
    return %arg0, %arg2, %c0_i32 : i32, i32, i32
  }
  func.func @transform_2(%arg0: i32, %arg1: i32, %arg2: i32) -> (i32, i32) {
    %c0_i32 = arith.constant 0 : i32
    return %arg0, %arg1 : i32, i32
  }
}

</mosaic_0001>

<llo_original>
// kernel: tpu_custom_call.1
$region0: #{tpu_custom_call.1}
  #allocation0 [shape = 'u32[]', space=smem, size = 0x4, offset = 0x4, fixed_abs, tag = 'smem constant byte address 0x4 - core index']
  #allocation1 [shape = 'u32[144,128]{1,0:T(1,128)}', space=vmem, size = 0x12000, scoped, tag = 'internal scratch']
  %s0 = inlined_call_operand.vmem [shape: f32[2,8,32], index: 0, kind: input, shape index: {}]
  %s1 = inlined_call_operand.vmem [shape: s32[2,8,1], index: 1, kind: input, shape index: {}]
  %s2 = inlined_call_operand.hbm [shape: f32[2,32], index: 2, kind: output, shape index: {}]
  %s3 = sld [smem:[#allocation0]]
  $region22: #{tpu_custom_call.1} parent=0
    _
  %s5 = ssub.s32 1, %s3
  %s6 = scalar_select 0, %s5, %s3
  $region1: #{tpu_custom_call.1} parent=0
    #allocation2 [shape = 'u8[1024]{0}', space=vmem, size = 0x400, scoped, tag = 'output window, operand 0, single buffered']
    #allocation3 [shape = 's32[1]{0}', space=sflag, size = 0x4, scoped, tag = 'scoped memory for tpu_custom_call.1']
    %7 = vsyncpa [#allocation3], 0
    // Predicated region
    $region2: #{tpu_custom_call.1} parent=1 // pred_check
      _
    $region3: #{tpu_custom_call.1} parent=1 // pred_check_branch
      %9 = sbr.rel (0) target = $region5
    $region4: #{tpu_custom_call.1} parent=1 // pred_region
      _
    $region5: #{tpu_custom_call.1} parent=1 // pred_fallthru
      _
    // Predicated region
    $region6: #{tpu_custom_call.1} parent=1 // pred_check
      _
    $region7: #{tpu_custom_call.1} parent=1 // pred_check_branch
      %11 = sbr.rel (0) target = $region9
    $region8: #{tpu_custom_call.1} parent=1 // pred_region
      _
    $region9: #{tpu_custom_call.1} parent=1 // pred_fallthru
      _
    %p12 = scmp.eq.s32.totalorder 0, 0
    // Predicated region
    $region10: #{tpu_custom_call.1} parent=1 // pred_check
      %p13 = pneg %p12
    $region11: #{tpu_custom_call.1} parent=1 // pred_check_branch
      %15 = sbr.rel (%p13) target = $region13
    $region12: #{tpu_custom_call.1} parent=1 // pred_region
      %vm16 = vcmask 254976
      %17 = vst.msk [vmem:[#allocation2] sm:$0x3] %vm16, inf
    $region13: #{tpu_custom_call.1} parent=1 // pred_fallthru
      _
    %v18 = vld [vmem:[%s0] sm:$0xff]
    %v19 = vld [vmem:[%s0 + $0x8] sm:$0xff]
    %v20 = vld [vmem:[%s1] sm:$0xff]
    %v21 = vld [vmem:[%s1 + $0x8] sm:$0xff]
    %vm22 = vcmp.eq.s32.totalorder %v20, 0
    %vm23 = vcmp.eq.s32.totalorder %v21, 0
    %v24 = vsel %vm22, 1, 0
    %v25 = vsel %vm23, 1, 0
    %26 = vset.pattern.permute.xlu0 0
    %27 = vperm.xlu0 %26, %v24
    %v28 = vpop.permute.xlu0 %27
    %29 = vset.pattern.permute.xlu0 0
    %30 = vperm.xlu0 %29, %v25
    %v31 = vpop.permute.xlu0 %30
    %vm32 = vcmp.eq.s32.totalorder %v28, 1
    %vm33 = vcmp.eq.s32.totalorder %v31, 1
    %v34 = vsel %vm32, 0.0001, %v18
    %v35 = vsel %vm33, 0.0001, %v19
    %vm36 = vcmask 261120
    %v37 = vsel %vm36, %v34, inf
    %v38 = vrot.slane %v37, 4
    %v39 = vmin.f32 %v37, %v38
    %v40 = vrot.slane %v39, 2
    %v41 = vmin.f32 %v39, %v40
    %v42 = vrot.slane %v41, 1
    %v43 = vmin.f32 %v41, %v42
    %v44 = vsel %vm36, %v35, inf
    %v45 = vrot.slane %v44, 4
    %v46 = vmin.f32 %v44, %v45
    %v47 = vrot.slane %v46, 2
    %v48 = vmin.f32 %v46, %v47
    %v49 = vrot.slane %v48, 1
    %v50 = vmin.f32 %v48, %v49
    %v51 = vld [vmem:[#allocation2] sm:$0x3]
    %vm54 = vcmask 1041409
    %v55 = vsel %vm54, %v50, %v43
    %v57 = vmin.f32 %v51, %v55
    %vm58 = vcmask 254976
    %59 = vst.msk [vmem:[#allocation2] sm:$0x3] %vm58, %v57
    // Predicated region
    $region14: #{tpu_custom_call.1} parent=1 // pred_check
      _
    $region15: #{tpu_custom_call.1} parent=1 // pred_check_branch
      %61 = sbr.rel (0) target = $region17
    $region16: #{tpu_custom_call.1} parent=1 // pred_region
      %s63 = ssub.s32 32, 32
      %64 = vsyncadd [#allocation3], %s63
      %s66 = sshll.u32 [#allocation2], 4
      %s67 = int_to_ptr.vmem [resolvable:$true] %s66
      %69 = dma.vmem_to_hbm [thread:$0]  %s67, 32, %s2, [#allocation3]
    $region17: #{tpu_custom_call.1} parent=1 // pred_fallthru
      _
    // Predicated region
    $region18: #{tpu_custom_call.1} parent=1 // pred_check
      _
    $region19: #{tpu_custom_call.1} parent=1 // pred_check_branch
      %71 = sbr.rel (0) target = $region21
    $region20: #{tpu_custom_call.1} parent=1 // pred_region
      %72 = dma.done [#allocation3], 32
    $region21: #{tpu_custom_call.1} parent=1 // pred_fallthru
      _
    %73 = vsyncpa [#allocation3], 1

</llo_original>
